<compile_context>
chip_gen: v5e
topology: v5e:2x2
jax: 0.10.0
libtpu: 0.0.40
codegen_flags: <defaults>
</compile_context>

<pallas_src>
import functools

import jax
import jax.numpy as jnp
from jax.experimental import pallas as pl
from jax.experimental.pallas import tpu as pltpu

_LANE = 128
_SUBLANE = 8
_TILE_BUDGET_BYTES = 2 * 1024 * 1024  # ~2 MiB per streamed x tile


def _make_positional_table(max_len: int, num_hiddens: int) -> jnp.ndarray:
    """P of shape (1, max_len, num_hiddens), same formula as the torch module."""
    pos = jnp.arange(max_len, dtype=jnp.float32).reshape(-1, 1)
    freqs = jnp.power(
        10000.0, jnp.arange(0, num_hiddens, 2, dtype=jnp.float32) / num_hiddens
    )
    X = pos / freqs  # (max_len, num_hiddens//2)
    P = jnp.zeros((1, max_len, num_hiddens), dtype=jnp.float32)
    P = P.at[:, :, 0::2].set(jnp.sin(X))
    P = P.at[:, :, 1::2].set(jnp.cos(X))
    return P


# ----------------------------- kernels ------------------------------------ #

def _pe_kernel_eval(x_ref, p_ref, o_ref):
    # (TB, TL) + (1, TL) broadcast add, already in the output dtype.
    o_ref[...] = x_ref[...] + p_ref[...]


def _pe_kernel_train(x_ref, p_ref, bits_ref, o_ref, *, threshold, scale):
    y = x_ref[...] + p_ref[...]
    # Inverted dropout, integer-domain threshold: keep iff bits >= p * 2^32.
    keep = bits_ref[...] >= jnp.uint32(threshold)
    o_ref[...] = jnp.where(keep, y * jnp.asarray(scale, y.dtype), jnp.zeros_like(y))


# ----------------------------- wrapper ------------------------------------ #

def _choose_tiles(B: int, L: int, itemsize: int):
    """Pick (TB, TL) for the flattened (B, L) slab.

    Small problems -> one full-array block (single grid step).  Larger ones ->
    lane-multiple tiles along L (and, for huge batches, sublane-multiple tiles
    along B) sized to ~_TILE_BUDGET_BYTES per streamed tile.
    """
    if B * L * itemsize <= _TILE_BUDGET_BYTES:
        return B, L

    if L >= _LANE:
        tl = (_TILE_BUDGET_BYTES // (B * itemsize)) // _LANE * _LANE
        tl = int(max(_LANE, min(tl, (L // _LANE) * _LANE)))
    else:
        tl = L  # last dim == full array dim is always allowed

    tb = B
    if B * tl * itemsize > _TILE_BUDGET_BYTES:
        tb = (_TILE_BUDGET_BYTES // (tl * itemsize)) // _SUBLANE * _SUBLANE
        tb = int(max(_SUBLANE, min(tb, B)))
        if tb >= B:
            tb = B
    return tb, tl


def positional_encoding_forward(
    x: jnp.ndarray,
    P: jnp.ndarray,
    *,
    dropout_rate: float,
    training: bool,
    key: jax.Array | None = None,
) -> jnp.ndarray:
    """x: (B, S, H).  P: (1, max_len, H).  Returns dropout(x + P[:, :S, :])."""
    B, S, H = x.shape
    max_len = P.shape[1]
    if S > max_len:
        raise ValueError(f"seq_len {S} exceeds positional table max_len {max_len}")

    L = S * H
    x2 = x.reshape(B, L)
    # Cast P once, outside the kernel (no per-iteration casts).
    p2 = P[0, :S, :].reshape(1, L).astype(x.dtype)

    tb, tl = _choose_tiles(B, L, x.dtype.itemsize)
    # Outer axis: L tiles.  Inner axis: batch tiles.  P's block index only
    # depends on the outer axis -> DMA'd once per L tile.
    grid = (pl.cdiv(L, tl), pl.cdiv(B, tb))

    x_spec = pl.BlockSpec((tb, tl), lambda l, b: (b, l))
    p_spec = pl.BlockSpec((1, tl), lambda l, b: (0, l))
    o_spec = pl.BlockSpec((tb, tl), lambda l, b: (b, l))

    compiler_params = pltpu.CompilerParams(
        dimension_semantics=("parallel", "parallel")  # v7x megacore can shard both
    )

    apply_dropout = bool(training) and float(dropout_rate) > 0.0

    if not apply_dropout:
        out2 = pl.pallas_call(
            _pe_kernel_eval,
            grid=grid,
            in_specs=[x_spec, p_spec],
            out_specs=o_spec,
            out_shape=jax.ShapeDtypeStruct((B, L), x.dtype),
            compiler_params=compiler_params,
        )(x2, p2)
    else:
        if float(dropout_rate) >= 1.0:
            return jnp.zeros_like(x)
        if key is None:
            key = jax.random.PRNGKey(0)
        # Random bits generated on the host-visible JAX side (portable), then
        # thresholded on-chip in the integer domain.
        bits = jax.random.bits(key, (B, L), dtype=jnp.uint32)
        threshold = min(int(round(float(dropout_rate) * (2.0**32))), 2**32 - 1)
        scale = 1.0 / (1.0 - float(dropout_rate))
        kernel = functools.partial(_pe_kernel_train, threshold=threshold, scale=scale)
        bits_spec = pl.BlockSpec((tb, tl), lambda l, b: (b, l))
        out2 = pl.pallas_call(
            kernel,
            grid=grid,
            in_specs=[x_spec, p_spec, bits_spec],
            out_specs=o_spec,
            out_shape=jax.ShapeDtypeStruct((B, L), x.dtype),
            compiler_params=compiler_params,
        )(x2, p2, bits)

    return out2.reshape(B, S, H)


# ------------------------------- demo -------------------------------------- #

if __name__ == "__main__":
    # Small shapes consistent with the module's usage in d2l chapter 10.6.
    batch, seq_len, num_hiddens = 2, 8, 32
    max_len = 1000
    dropout_rate = 0.5

    key = jax.random.PRNGKey(0)
    x = jax.random.normal(key, (batch, seq_len, num_hiddens), dtype=jnp.float32)

    P = _make_positional_table(max_len, num_hiddens)

    # Eval-mode pass (deterministic): dropout is identity.
    out_eval = positional_encoding_forward(
        x, P, dropout_rate=dropout_rate, training=False
    )
    out_eval = jax.block_until_ready(out_eval)

    ref = x + P[:, :seq_len, :]
    assert out_eval.shape == (batch, seq_len, num_hiddens)
    assert jnp.allclose(out_eval, ref, atol=1e-5), "mismatch vs reference (eval)"

    # Training-mode pass: every element is either 0 or (x+P) * 1/(1-p).
    drop_key = jax.random.PRNGKey(1234)
    out_train = positional_encoding_forward(
        x, P, dropout_rate=dropout_rate, training=True, key=drop_key
    )
    out_train = jax.block_until_ready(out_train)
    assert out_train.shape == (batch, seq_len, num_hiddens)
    scaled = ref * (1.0 / (1.0 - dropout_rate))
    ok = jnp.isclose(out_train, 0.0) | jnp.isclose(out_train, scaled, atol=1e-5)
    assert bool(jnp.all(ok)), "training output not {0, scaled} valued"

    print("KERNEL_OK")
</pallas_src>

<mosaic_0001>
module attributes {stable_mosaic.version = 11 : i64} {
  func.func @_pe_kernel_eval(%arg0: i32, %arg1: i32, %arg2: memref<2x256xf32, #tpu.memory_space<vmem>>, %arg3: memref<1x256xf32, #tpu.memory_space<vmem>>, %arg4: memref<2x256xf32, #tpu.memory_space<vmem>>) attributes {dimension_semantics = [#tpu.dimension_semantics<parallel>, #tpu.dimension_semantics<parallel>], iteration_bounds = array<i64: 1, 1>, scalar_prefetch = 0 : i64, scratch_operands = 0 : i64, tpu.core_type = #tpu.core_type<tc>, window_params = [{transform_indices = @transform_0, window_bounds = array<i64: 2, 256>}, {transform_indices = @transform_1, window_bounds = array<i64: 1, 256>}, {transform_indices = @transform_2, window_bounds = array<i64: 2, 256>}]} {
    %c0 = arith.constant 0 : index
    %c0_0 = arith.constant 0 : index
    %0 = vector.load %arg2[%c0, %c0_0] : memref<2x256xf32, #tpu.memory_space<vmem>>, vector<2x256xf32>
    %c0_1 = arith.constant 0 : index
    %c0_2 = arith.constant 0 : index
    %1 = vector.load %arg3[%c0_1, %c0_2] : memref<1x256xf32, #tpu.memory_space<vmem>>, vector<1x256xf32>
    %2 = vector.broadcast %1 : vector<1x256xf32> to vector<2x256xf32>
    %3 = arith.addf %0, %2 : vector<2x256xf32>
    %c0_3 = arith.constant 0 : index
    %c0_4 = arith.constant 0 : index
    %4 = vector.load %arg4[%c0_3, %c0_4] : memref<2x256xf32, #tpu.memory_space<vmem>>, vector<2x256xf32>
    tpu.vector_store %arg4[%c0_3, %c0_4], %3 {strides = array<i32>} : memref<2x256xf32, #tpu.memory_space<vmem>>, vector<2x256xf32>,
    return
  }
  func.func @transform_0(%arg0: i32, %arg1: i32) -> (i32, i32) {
    %c0_i32 = arith.constant 0 : i32
    return %arg1, %arg0 : i32, i32
  }
  func.func @transform_1(%arg0: i32, %arg1: i32) -> (i32, i32) {
    %c0_i32 = arith.constant 0 : i32
    %c0_i32_0 = arith.constant 0 : i32
    return %c0_i32, %arg0 : i32, i32
  }
  func.func @transform_2(%arg0: i32, %arg1: i32) -> (i32, i32) {
    %c0_i32 = arith.constant 0 : i32
    return %arg1, %arg0 : i32, i32
  }
}

</mosaic_0001>

<llo_original>
// kernel: tpu_custom_call.1
$region0: #{tpu_custom_call.1}
  #allocation0 [shape = 'u32[]', space=smem, size = 0x4, offset = 0x4, fixed_abs, tag = 'smem constant byte address 0x4 - core index']
  #allocation1 [shape = 'u32[72,128]{1,0:T(1,128)}', space=vmem, size = 0x9000, scoped, tag = 'internal scratch']
  %s0 = inlined_call_operand.hbm [shape: f32[2,256], index: 0, kind: input, shape index: {}]
  %s1 = inlined_call_operand.hbm [shape: f32[1,256], index: 1, kind: input, shape index: {}]
  %s2 = inlined_call_operand.hbm [shape: f32[2,256], index: 2, kind: output, shape index: {}]
  %s3 = sld [smem:[#allocation0]]
  $region26: #{tpu_custom_call.1} parent=0
    _
  %s5 = ssub.s32 1, %s3
  %s6 = scalar_select 0, %s5, %s3
  $region1: #{tpu_custom_call.1} parent=0
    #allocation2 [shape = 'u8[2048]{0}', space=vmem, size = 0x800, scoped, tag = 'input window, operand 0, single buffered']
    #allocation3 [shape = 's32[1]{0}', space=sflag, size = 0x4, scoped, tag = 'scoped memory for tpu_custom_call.1']
    #allocation4 [shape = 's32[1]{0}', space=sflag, size = 0x4, scoped, tag = 'scoped memory for tpu_custom_call.1']
    #allocation5 [shape = 'u8[1024]{0}', space=vmem, size = 0x400, scoped, tag = 'input window, operand 1, single buffered']
    #allocation6 [shape = 's32[1]{0}', space=sflag, size = 0x4, scoped, tag = 'scoped memory for tpu_custom_call.1']
    #allocation7 [shape = 'u8[2048]{0}', space=vmem, size = 0x800, scoped, tag = 'output window, operand 0, single buffered']
    %7 = vsyncpa [#allocation3], 0
    %8 = vsyncpa [#allocation6], 0
    %9 = vsyncpa [#allocation4], 0
    // Predicated region
    $region2: #{tpu_custom_call.1} parent=1 // pred_check
      _
    $region3: #{tpu_custom_call.1} parent=1 // pred_check_branch
      %11 = sbr.rel (0) target = $region5
    $region4: #{tpu_custom_call.1} parent=1 // pred_region
      %13 = vsyncadd [#allocation3], 0
      %s15 = sshll.u32 %s0, 4
      %s16 = int_to_ptr.hbm [resolvable:$true] %s15
      %s17 = sshll.u32 [#allocation2], 4
      %s18 = int_to_ptr.vmem [resolvable:$true] %s17
      %20 = dma.hbm_to_vmem [thread:$0]  %s16, 64, %s18, [#allocation3]
    $region5: #{tpu_custom_call.1} parent=1 // pred_fallthru
      _
    // Predicated region
    $region6: #{tpu_custom_call.1} parent=1 // pred_check
      _
    $region7: #{tpu_custom_call.1} parent=1 // pred_check_branch
      %22 = sbr.rel (0) target = $region9
    $region8: #{tpu_custom_call.1} parent=1 // pred_region
      %24 = vsyncadd [#allocation6], 0
      %s26 = sshll.u32 %s1, 4
      %s27 = int_to_ptr.hbm [resolvable:$true] %s26
      %s28 = sshll.u32 [#allocation5], 4
      %s29 = int_to_ptr.vmem [resolvable:$true] %s28
      %31 = dma.hbm_to_vmem [thread:$0]  %s27, 32, %s29, [#allocation6]
    $region9: #{tpu_custom_call.1} parent=1 // pred_fallthru
      _
    // Predicated region
    $region10: #{tpu_custom_call.1} parent=1 // pred_check
      _
    $region11: #{tpu_custom_call.1} parent=1 // pred_check_branch
      %33 = sbr.rel (0) target = $region13
    $region12: #{tpu_custom_call.1} parent=1 // pred_region
      %35 = dma.done [#allocation3], 64
    $region13: #{tpu_custom_call.1} parent=1 // pred_fallthru
      _
    // Predicated region
    $region14: #{tpu_custom_call.1} parent=1 // pred_check
      _
    $region15: #{tpu_custom_call.1} parent=1 // pred_check_branch
      %37 = sbr.rel (0) target = $region17
    $region16: #{tpu_custom_call.1} parent=1 // pred_region
      %39 = dma.done [#allocation6], 32
    $region17: #{tpu_custom_call.1} parent=1 // pred_fallthru
      _
    %v40 = vld [vmem:[#allocation2] sm:$0xf]
    %v41 = vld [vmem:[#allocation5] sm:$0x3]
    %v43 = vperm.slane %v41, 0
    %v44 = vperm.slane %v41, 1
    %v45 = vrot.slane %v44, 6
    %vm46 = vcmask 1041408
    %v47 = vsel %vm46, %v43, %v45
    %v49 = vadd.f32 %v40, %v47
    %50 = vst [vmem:[#allocation7] sm:$0xf] %v49
    // Predicated region
    $region18: #{tpu_custom_call.1} parent=1 // pred_check
      _
    $region19: #{tpu_custom_call.1} parent=1 // pred_check_branch
      %52 = sbr.rel (0) target = $region21
    $region20: #{tpu_custom_call.1} parent=1 // pred_region
      %54 = vsyncadd [#allocation4], 0
      %s56 = sshll.u32 [#allocation7], 4
      %s57 = int_to_ptr.vmem [resolvable:$true] %s56
      %s58 = sshll.u32 %s2, 4
      %s59 = int_to_ptr.hbm [resolvable:$true] %s58
      %61 = dma.vmem_to_hbm [thread:$0]  %s57, 64, %s59, [#allocation4]
    $region21: #{tpu_custom_call.1} parent=1 // pred_fallthru
      _
    // Predicated region
    $region22: #{tpu_custom_call.1} parent=1 // pred_check
      _
    $region23: #{tpu_custom_call.1} parent=1 // pred_check_branch
      %63 = sbr.rel (0) target = $region25
    $region24: #{tpu_custom_call.1} parent=1 // pred_region
      %65 = dma.done [#allocation4], 64
    $region25: #{tpu_custom_call.1} parent=1 // pred_fallthru
      _
    %66 = vsyncpa [#allocation3], 1
    %67 = vsyncpa [#allocation6], 1
    %68 = vsyncpa [#allocation4], 1

</llo_original>
